<compile_context>
chip_gen: v7x
topology: tpu7x:2x2x1
jax: 0.10.0
libtpu: 0.0.40
codegen_flags: <defaults>
</compile_context>

<pallas_src>
import functools

import jax
import jax.numpy as jnp
from jax import lax
from jax.experimental import pallas as pl
from jax.experimental.pallas import tpu as pltpu


def _shifted_dot_conv_kernel(x_ref, w_ref, b_ref, o_ref, *, k, H, W):
    """Conv2d for one batch element via k*k shifted MXU dots.

    x_ref: (k, Cin, (H+2p)*W)  bf16  width-shifted, height-padded input copies
    w_ref: (k*k, Cout, Cin)    bf16  per-tap weight matrices (resident)
    b_ref: (Cout, 1)           f32   bias (resident)
    o_ref: (Cout, H*W)         f32   conv output, NCHW-flat (lane-dense store)
    """
    HW = H * W
    acc = None
    for kh in range(k):          # unrolled at trace time (k*k = 9 taps)
        for kw in range(k):
            # static, contiguous lane slice: rows [kh, kh+H) of the kw-shifted copy
            xs = x_ref[kw, :, pl.ds(kh * W, HW)]            # (Cin, H*W) bf16
            wk = w_ref[kh * k + kw]                          # (Cout, Cin) bf16
            d = jnp.dot(wk, xs, preferred_element_type=jnp.float32)
            acc = d if acc is None else acc + d
    # f32 epilogue (bias add) and f32 store
    o_ref[...] = (acc + b_ref[...]).astype(o_ref.dtype)


def pixel_shuffle_forward(x_nchw, weight, bias, scale, kernel_size):
    """PixelShuffle module forward: Conv2d(k, padding=k//2) + nn.PixelShuffle(scale).

    x_nchw: (N, C, H, W)
    weight: (C*scale^2, C, k, k)   (PyTorch Conv2d OIHW layout)
    bias:   (C*scale^2,)
    returns (N, C, H*scale, W*scale)  NCHW, matching torch.
    """
    N, Cin, H, W = x_nchw.shape
    k = kernel_size
    assert k % 2 == 1, "only odd kernel_size matches PyTorch padding=k//2 output shape"
    p = k // 2
    Cout = weight.shape[0]
    r = scale
    assert Cout == Cin * r * r

    compute_dtype = jnp.bfloat16
    Hp = H + 2 * p
    HW = H * W

    # ---- halo staging (k x small input, one cheap XLA pass; replaces 9x im2col) ----
    xb = x_nchw.astype(compute_dtype)
    xp = jnp.pad(xb, ((0, 0), (0, 0), (p, p), (p, p)))            # (N, Cin, H+2p, W+2p)
    xs = jnp.stack([xp[:, :, :, kw:kw + W] for kw in range(k)], axis=1)  # (N,k,Cin,H+2p,W)
    xs = xs.reshape(N, k, Cin, Hp * W)

    # per-tap weight matrices: (k, k, Cout, Cin) -> (k*k, Cout, Cin)
    w_taps = jnp.transpose(weight, (2, 3, 0, 1)).reshape(k * k, Cout, Cin)
    w_taps = w_taps.astype(compute_dtype)
    b2d = bias.astype(jnp.float32).reshape(Cout, 1)

    kernel = functools.partial(_shifted_dot_conv_kernel, k=k, H=H, W=W)

    flops = 2 * N * HW * Cout * Cin * k * k
    bytes_accessed = (xs.size * xs.dtype.itemsize
                      + w_taps.size * w_taps.dtype.itemsize
                      + b2d.size * b2d.dtype.itemsize
                      + N * Cout * HW * 4)

    y_flat = pl.pallas_call(
        kernel,
        out_shape=jax.ShapeDtypeStruct((N, Cout, HW), jnp.float32),
        grid=(N,),  # >= 2 steps in the demo, so both v7x TensorCores get work
        in_specs=[
            pl.BlockSpec((None, k, Cin, Hp * W), lambda n: (n, 0, 0, 0)),
            pl.BlockSpec((k * k, Cout, Cin), lambda n: (0, 0, 0)),   # resident
            pl.BlockSpec((Cout, 1), lambda n: (0, 0)),               # resident
        ],
        out_specs=pl.BlockSpec((None, Cout, HW), lambda n: (n, 0, 0)),
        compiler_params=pltpu.CompilerParams(
            dimension_semantics=("parallel",),
            vmem_limit_bytes=32 * 1024 * 1024,
        ),
        cost_estimate=pl.CostEstimate(
            flops=flops, transcendentals=0, bytes_accessed=bytes_accessed),
    )(xs, w_taps, b2d)

    # Conv output is already native NCHW: free reshape.
    y = y_flat.reshape(N, Cout, H, W)

    # ---- pixel shuffle: exactly one transpose over the upsampled tensor ----
    y = y.reshape(N, Cin, r, r, H, W)
    y = jnp.transpose(y, (0, 1, 4, 2, 5, 3))                 # (N, C, H, r, W, r)
    return y.reshape(N, Cin, H * r, W * r)


def _reference_forward(x_nchw, weight, bias, scale, kernel_size):
    """Pure-JAX reference (lax conv + pixel shuffle) for validation."""
    pad = kernel_size // 2
    y = lax.conv_general_dilated(
        x_nchw, weight,
        window_strides=(1, 1),
        padding=((pad, pad), (pad, pad)),
        dimension_numbers=("NCHW", "OIHW", "NCHW"),
        precision=lax.Precision.HIGHEST,
    ) + bias.reshape(1, -1, 1, 1)
    N, Crr, H, W = y.shape
    r = scale
    C = Crr // (r * r)
    y = y.reshape(N, C, r, r, H, W)
    y = jnp.transpose(y, (0, 1, 4, 2, 5, 3))
    return y.reshape(N, C, H * r, W * r)


if __name__ == "__main__":
    # Module hyperparameters (small, consistent with the PyTorch module)
    dim = 4
    scale = 2
    kernel_size = 3

    N, H, W = 2, 16, 16
    Cout = dim * scale ** 2

    key = jax.random.PRNGKey(0)
    kx, kw_, kb = jax.random.split(key, 3)

    x = jax.random.normal(kx, (N, dim, H, W), dtype=jnp.float32)

    fan_in = dim * kernel_size * kernel_size
    bound = 1.0 / jnp.sqrt(fan_in)
    weight = jax.random.uniform(kw_, (Cout, dim, kernel_size, kernel_size),
                                minval=-bound, maxval=bound, dtype=jnp.float32)
    bias = jax.random.uniform(kb, (Cout,), minval=-bound, maxval=bound,
                              dtype=jnp.float32)

    out = pixel_shuffle_forward(x, weight, bias, scale, kernel_size)
    out = jax.block_until_ready(out)

    assert out.shape == (N, dim, H * scale, W * scale), out.shape

    # Tight check: reference fed the same bf16-rounded inputs (validates the
    # kernel's math / layout / tap ordering to near machine precision).
    x_b = x.astype(jnp.bfloat16).astype(jnp.float32)
    w_b = weight.astype(jnp.bfloat16).astype(jnp.float32)
    ref_tight = _reference_forward(x_b, w_b, bias, scale, kernel_size)
    err_tight = float(jnp.max(jnp.abs(out - ref_tight)))
    assert jnp.allclose(out, ref_tight, rtol=1e-4, atol=1e-4), err_tight

    # Loose end-to-end check vs. pure-f32 reference (gap = deliberate bf16 cast).
    ref_f32 = _reference_forward(x, weight, bias, scale, kernel_size)
    err_loose = float(jnp.max(jnp.abs(out - ref_f32)))
    assert jnp.allclose(out, ref_f32, rtol=3e-2, atol=3e-2), err_loose

    print("KERNEL_OK")
</pallas_src>

<mosaic_0001>
module attributes {stable_mosaic.version = 11 : i64} {
  func.func @_shifted_dot_conv_kernel(%arg0: i32, %arg1: memref<1x3x4x288xbf16, #tpu.memory_space<vmem>>, %arg2: memref<9x16x4xbf16, #tpu.memory_space<vmem>>, %arg3: memref<16x1xf32, #tpu.memory_space<vmem>>, %arg4: memref<1x16x256xf32, #tpu.memory_space<vmem>>) attributes {dimension_semantics = [#tpu.dimension_semantics<parallel>], iteration_bounds = array<i64: 2>, scalar_prefetch = 0 : i64, scratch_operands = 0 : i64, tpu.core_type = #tpu.core_type<tc>, window_params = [{transform_indices = @transform_0, window_bounds = array<i64: 1, 3, 4, 288>}, {pipeline_mode = #tpu.pipeline_mode<synchronous>, transform_indices = @transform_1, window_bounds = array<i64: 9, 16, 4>}, {pipeline_mode = #tpu.pipeline_mode<synchronous>, transform_indices = @transform_2, window_bounds = array<i64: 16, 1>}, {transform_indices = @transform_3, window_bounds = array<i64: 1, 16, 256>}]} {
    %c0 = arith.constant 0 : index
    %c0_0 = arith.constant 0 : index
    %c0_1 = arith.constant 0 : index
    %c0_2 = arith.constant 0 : index
    %0 = vector.load %arg1[%c0, %c0_0, %c0_1, %c0_2] : memref<1x3x4x288xbf16, #tpu.memory_space<vmem>>, vector<1x1x4x256xbf16>
    %1 = vector.shape_cast %0 : vector<1x1x4x256xbf16> to vector<4x256xbf16>
    %c0_3 = arith.constant 0 : index
    %c0_4 = arith.constant 0 : index
    %c0_5 = arith.constant 0 : index
    %2 = vector.load %arg2[%c0_3, %c0_4, %c0_5] : memref<9x16x4xbf16, #tpu.memory_space<vmem>>, vector<1x16x4xbf16>
    %3 = vector.shape_cast %2 : vector<1x16x4xbf16> to vector<16x4xbf16>
    %cst = arith.constant dense<0.000000e+00> : vector<16x256xf32>
    %4 = tpu.matmul %3, %1, %cst {dimension_numbers = #tpu.dot_dimension_numbers<[1], [0], [0], [1], [0, 0, 1, 1], [], []>} : vector<16x4xbf16>, vector<4x256xbf16>, vector<16x256xf32> -> vector<16x256xf32>
    %c0_6 = arith.constant 0 : index
    %c1 = arith.constant 1 : index
    %c0_7 = arith.constant 0 : index
    %c0_8 = arith.constant 0 : index
    %5 = vector.load %arg1[%c0_6, %c1, %c0_7, %c0_8] : memref<1x3x4x288xbf16, #tpu.memory_space<vmem>>, vector<1x1x4x256xbf16>
    %6 = vector.shape_cast %5 : vector<1x1x4x256xbf16> to vector<4x256xbf16>
    %c1_9 = arith.constant 1 : index
    %c0_10 = arith.constant 0 : index
    %c0_11 = arith.constant 0 : index
    %7 = vector.load %arg2[%c1_9, %c0_10, %c0_11] : memref<9x16x4xbf16, #tpu.memory_space<vmem>>, vector<1x16x4xbf16>
    %8 = vector.shape_cast %7 : vector<1x16x4xbf16> to vector<16x4xbf16>
    %cst_12 = arith.constant dense<0.000000e+00> : vector<16x256xf32>
    %9 = tpu.matmul %8, %6, %cst_12 {dimension_numbers = #tpu.dot_dimension_numbers<[1], [0], [0], [1], [0, 0, 1, 1], [], []>} : vector<16x4xbf16>, vector<4x256xbf16>, vector<16x256xf32> -> vector<16x256xf32>
    %10 = arith.addf %4, %9 : vector<16x256xf32>
    %c0_13 = arith.constant 0 : index
    %c2 = arith.constant 2 : index
    %c0_14 = arith.constant 0 : index
    %c0_15 = arith.constant 0 : index
    %11 = vector.load %arg1[%c0_13, %c2, %c0_14, %c0_15] : memref<1x3x4x288xbf16, #tpu.memory_space<vmem>>, vector<1x1x4x256xbf16>
    %12 = vector.shape_cast %11 : vector<1x1x4x256xbf16> to vector<4x256xbf16>
    %c2_16 = arith.constant 2 : index
    %c0_17 = arith.constant 0 : index
    %c0_18 = arith.constant 0 : index
    %13 = vector.load %arg2[%c2_16, %c0_17, %c0_18] : memref<9x16x4xbf16, #tpu.memory_space<vmem>>, vector<1x16x4xbf16>
    %14 = vector.shape_cast %13 : vector<1x16x4xbf16> to vector<16x4xbf16>
    %cst_19 = arith.constant dense<0.000000e+00> : vector<16x256xf32>
    %15 = tpu.matmul %14, %12, %cst_19 {dimension_numbers = #tpu.dot_dimension_numbers<[1], [0], [0], [1], [0, 0, 1, 1], [], []>} : vector<16x4xbf16>, vector<4x256xbf16>, vector<16x256xf32> -> vector<16x256xf32>
    %16 = arith.addf %10, %15 : vector<16x256xf32>
    %c0_20 = arith.constant 0 : index
    %c0_21 = arith.constant 0 : index
    %c0_22 = arith.constant 0 : index
    %c16 = arith.constant 16 : index
    %17 = vector.load %arg1[%c0_20, %c0_21, %c0_22, %c16] : memref<1x3x4x288xbf16, #tpu.memory_space<vmem>>, vector<1x1x4x256xbf16>
    %18 = vector.shape_cast %17 : vector<1x1x4x256xbf16> to vector<4x256xbf16>
    %c3 = arith.constant 3 : index
    %c0_23 = arith.constant 0 : index
    %c0_24 = arith.constant 0 : index
    %19 = vector.load %arg2[%c3, %c0_23, %c0_24] : memref<9x16x4xbf16, #tpu.memory_space<vmem>>, vector<1x16x4xbf16>
    %20 = vector.shape_cast %19 : vector<1x16x4xbf16> to vector<16x4xbf16>
    %cst_25 = arith.constant dense<0.000000e+00> : vector<16x256xf32>
    %21 = tpu.matmul %20, %18, %cst_25 {dimension_numbers = #tpu.dot_dimension_numbers<[1], [0], [0], [1], [0, 0, 1, 1], [], []>} : vector<16x4xbf16>, vector<4x256xbf16>, vector<16x256xf32> -> vector<16x256xf32>
    %22 = arith.addf %16, %21 : vector<16x256xf32>
    %c0_26 = arith.constant 0 : index
    %c1_27 = arith.constant 1 : index
    %c0_28 = arith.constant 0 : index
    %c16_29 = arith.constant 16 : index
    %23 = vector.load %arg1[%c0_26, %c1_27, %c0_28, %c16_29] : memref<1x3x4x288xbf16, #tpu.memory_space<vmem>>, vector<1x1x4x256xbf16>
    %24 = vector.shape_cast %23 : vector<1x1x4x256xbf16> to vector<4x256xbf16>
    %c4 = arith.constant 4 : index
    %c0_30 = arith.constant 0 : index
    %c0_31 = arith.constant 0 : index
    %25 = vector.load %arg2[%c4, %c0_30, %c0_31] : memref<9x16x4xbf16, #tpu.memory_space<vmem>>, vector<1x16x4xbf16>
    %26 = vector.shape_cast %25 : vector<1x16x4xbf16> to vector<16x4xbf16>
    %cst_32 = arith.constant dense<0.000000e+00> : vector<16x256xf32>
    %27 = tpu.matmul %26, %24, %cst_32 {dimension_numbers = #tpu.dot_dimension_numbers<[1], [0], [0], [1], [0, 0, 1, 1], [], []>} : vector<16x4xbf16>, vector<4x256xbf16>, vector<16x256xf32> -> vector<16x256xf32>
    %28 = arith.addf %22, %27 : vector<16x256xf32>
    %c0_33 = arith.constant 0 : index
    %c2_34 = arith.constant 2 : index
    %c0_35 = arith.constant 0 : index
    %c16_36 = arith.constant 16 : index
    %29 = vector.load %arg1[%c0_33, %c2_34, %c0_35, %c16_36] : memref<1x3x4x288xbf16, #tpu.memory_space<vmem>>, vector<1x1x4x256xbf16>
    %30 = vector.shape_cast %29 : vector<1x1x4x256xbf16> to vector<4x256xbf16>
    %c5 = arith.constant 5 : index
    %c0_37 = arith.constant 0 : index
    %c0_38 = arith.constant 0 : index
    %31 = vector.load %arg2[%c5, %c0_37, %c0_38] : memref<9x16x4xbf16, #tpu.memory_space<vmem>>, vector<1x16x4xbf16>
    %32 = vector.shape_cast %31 : vector<1x16x4xbf16> to vector<16x4xbf16>
    %cst_39 = arith.constant dense<0.000000e+00> : vector<16x256xf32>
    %33 = tpu.matmul %32, %30, %cst_39 {dimension_numbers = #tpu.dot_dimension_numbers<[1], [0], [0], [1], [0, 0, 1, 1], [], []>} : vector<16x4xbf16>, vector<4x256xbf16>, vector<16x256xf32> -> vector<16x256xf32>
    %34 = arith.addf %28, %33 : vector<16x256xf32>
    %c0_40 = arith.constant 0 : index
    %c0_41 = arith.constant 0 : index
    %c0_42 = arith.constant 0 : index
    %c32 = arith.constant 32 : index
    %35 = vector.load %arg1[%c0_40, %c0_41, %c0_42, %c32] : memref<1x3x4x288xbf16, #tpu.memory_space<vmem>>, vector<1x1x4x256xbf16>
    %36 = vector.shape_cast %35 : vector<1x1x4x256xbf16> to vector<4x256xbf16>
    %c6 = arith.constant 6 : index
    %c0_43 = arith.constant 0 : index
    %c0_44 = arith.constant 0 : index
    %37 = vector.load %arg2[%c6, %c0_43, %c0_44] : memref<9x16x4xbf16, #tpu.memory_space<vmem>>, vector<1x16x4xbf16>
    %38 = vector.shape_cast %37 : vector<1x16x4xbf16> to vector<16x4xbf16>
    %cst_45 = arith.constant dense<0.000000e+00> : vector<16x256xf32>
    %39 = tpu.matmul %38, %36, %cst_45 {dimension_numbers = #tpu.dot_dimension_numbers<[1], [0], [0], [1], [0, 0, 1, 1], [], []>} : vector<16x4xbf16>, vector<4x256xbf16>, vector<16x256xf32> -> vector<16x256xf32>
    %40 = arith.addf %34, %39 : vector<16x256xf32>
    %c0_46 = arith.constant 0 : index
    %c1_47 = arith.constant 1 : index
    %c0_48 = arith.constant 0 : index
    %c32_49 = arith.constant 32 : index
    %41 = vector.load %arg1[%c0_46, %c1_47, %c0_48, %c32_49] : memref<1x3x4x288xbf16, #tpu.memory_space<vmem>>, vector<1x1x4x256xbf16>
    %42 = vector.shape_cast %41 : vector<1x1x4x256xbf16> to vector<4x256xbf16>
    %c7 = arith.constant 7 : index
    %c0_50 = arith.constant 0 : index
    %c0_51 = arith.constant 0 : index
    %43 = vector.load %arg2[%c7, %c0_50, %c0_51] : memref<9x16x4xbf16, #tpu.memory_space<vmem>>, vector<1x16x4xbf16>
    %44 = vector.shape_cast %43 : vector<1x16x4xbf16> to vector<16x4xbf16>
    %cst_52 = arith.constant dense<0.000000e+00> : vector<16x256xf32>
    %45 = tpu.matmul %44, %42, %cst_52 {dimension_numbers = #tpu.dot_dimension_numbers<[1], [0], [0], [1], [0, 0, 1, 1], [], []>} : vector<16x4xbf16>, vector<4x256xbf16>, vector<16x256xf32> -> vector<16x256xf32>
    %46 = arith.addf %40, %45 : vector<16x256xf32>
    %c0_53 = arith.constant 0 : index
    %c2_54 = arith.constant 2 : index
    %c0_55 = arith.constant 0 : index
    %c32_56 = arith.constant 32 : index
    %47 = vector.load %arg1[%c0_53, %c2_54, %c0_55, %c32_56] : memref<1x3x4x288xbf16, #tpu.memory_space<vmem>>, vector<1x1x4x256xbf16>
    %48 = vector.shape_cast %47 : vector<1x1x4x256xbf16> to vector<4x256xbf16>
    %c8 = arith.constant 8 : index
    %c0_57 = arith.constant 0 : index
    %c0_58 = arith.constant 0 : index
    %49 = vector.load %arg2[%c8, %c0_57, %c0_58] : memref<9x16x4xbf16, #tpu.memory_space<vmem>>, vector<1x16x4xbf16>
    %50 = vector.shape_cast %49 : vector<1x16x4xbf16> to vector<16x4xbf16>
    %cst_59 = arith.constant dense<0.000000e+00> : vector<16x256xf32>
    %51 = tpu.matmul %50, %48, %cst_59 {dimension_numbers = #tpu.dot_dimension_numbers<[1], [0], [0], [1], [0, 0, 1, 1], [], []>} : vector<16x4xbf16>, vector<4x256xbf16>, vector<16x256xf32> -> vector<16x256xf32>
    %52 = arith.addf %46, %51 : vector<16x256xf32>
    %c0_60 = arith.constant 0 : index
    %c0_61 = arith.constant 0 : index
    %53 = vector.load %arg3[%c0_60, %c0_61] : memref<16x1xf32, #tpu.memory_space<vmem>>, vector<16x1xf32>
    %54 = vector.broadcast %53 : vector<16x1xf32> to vector<16x256xf32>
    %55 = arith.addf %52, %54 : vector<16x256xf32>
    %c0_62 = arith.constant 0 : index
    %c0_63 = arith.constant 0 : index
    %c0_64 = arith.constant 0 : index
    %56 = vector.load %arg4[%c0_62, %c0_63, %c0_64] : memref<1x16x256xf32, #tpu.memory_space<vmem>>, vector<1x16x256xf32>
    %57 = vector.shape_cast %56 : vector<1x16x256xf32> to vector<16x256xf32>
    %58 = vector.shape_cast %55 : vector<16x256xf32> to vector<1x16x256xf32>
    tpu.vector_store %arg4[%c0_62, %c0_63, %c0_64], %58 {strides = array<i32>} : memref<1x16x256xf32, #tpu.memory_space<vmem>>, vector<1x16x256xf32>,
    return
  }
  func.func @transform_0(%arg0: i32) -> (i32, i32, i32, i32) {
    %c0_i32 = arith.constant 0 : i32
    %c0_i32_0 = arith.constant 0 : i32
    %c0_i32_1 = arith.constant 0 : i32
    %c0_i32_2 = arith.constant 0 : i32
    return %arg0, %c0_i32, %c0_i32_0, %c0_i32_1 : i32, i32, i32, i32
  }
  func.func @transform_1(%arg0: i32) -> (i32, i32, i32) {
    %c0_i32 = arith.constant 0 : i32
    %c0_i32_0 = arith.constant 0 : i32
    %c0_i32_1 = arith.constant 0 : i32
    %c0_i32_2 = arith.constant 0 : i32
    return %c0_i32, %c0_i32_0, %c0_i32_1 : i32, i32, i32
  }
  func.func @transform_2(%arg0: i32) -> (i32, i32) {
    %c0_i32 = arith.constant 0 : i32
    %c0_i32_0 = arith.constant 0 : i32
    %c0_i32_1 = arith.constant 0 : i32
    return %c0_i32, %c0_i32_0 : i32, i32
  }
  func.func @transform_3(%arg0: i32) -> (i32, i32, i32) {
    %c0_i32 = arith.constant 0 : i32
    %c0_i32_0 = arith.constant 0 : i32
    %c0_i32_1 = arith.constant 0 : i32
    return %arg0, %c0_i32, %c0_i32_0 : i32, i32, i32
  }
}

</mosaic_0001>

<llo_original>
// kernel: tpu_custom_call.1
$region0: #{tpu_custom_call.1}
  #allocation0 [shape = 'u32[]', space=smem, size = 0x4, offset = 0x4, fixed_abs, tag = 'smem constant byte address 0x4 - core index']
  #allocation1 [shape = 'u32[144,128]{1,0:T(1,128)}', space=vmem, size = 0x12000, scoped, tag = 'internal scratch']
  %s0 = inlined_call_operand.vmem [shape: bf16[2,3,4,288], index: 0, kind: input, shape index: {}]
  %s1 = inlined_call_operand.vmem [shape: bf16[9,16,4], index: 1, kind: input, shape index: {}]
  %s2 = inlined_call_operand.vmem [shape: f32[16,1], index: 2, kind: input, shape index: {}]
  %s3 = inlined_call_operand.hbm [shape: f32[2,16,256], index: 3, kind: output, shape index: {}]
  %s4 = sld [smem:[#allocation0]]
  $region45: #{tpu_custom_call.1} parent=0
    _
  %s6 = ssub.s32 1, %s4
  %s7 = scalar_select 0, %s6, %s4
  $region1: #{tpu_custom_call.1} parent=0
    #allocation2 [shape = 'u8[32768]{0}', space=vmem, size = 0x8000, scoped, tag = 'output window, operand 0']
    #allocation3 [shape = 's32[2]{0}', space=sflag, size = 0x8, scoped, tag = 'scoped memory for tpu_custom_call.1']
    %8 = vsyncpa [#allocation3], 0
    %s9 = scalar_lea.sflag [#allocation3], 1
    %10 = vsyncpa %s9, 0
    loop: start=0, step=1, limit=4
    $region2: #{tpu_custom_call.1} parent=1 // loop_pre_header
      _
    $region3: #{tpu_custom_call.1} parent=1 // loop_header
      %s12 = sphi 0, %s16
      %p13 = scmp.ge.s32.totalorder %s12, 4
      %s22 = sphi 0, %s24
      %s25 = sphi 0, %s22
      %s26 = sphi 0, %s25
      %s42 = sphi 0, %s26
      %s46 = sphi 0, %s46
      %s48 = sphi 0, %s46
      %s49 = sphi 0, %s48
      %s63 = sphi 0, %s49
      %s67 = sphi 0, %s67
      %s69 = sphi 0, %s67
      %s70 = sphi 0, %s69
      %s84 = sphi 0, %s70
      %s90 = sphi 0, %s92
      %s93 = sphi 0, %s90
      %s94 = sphi 0, %s93
      %s110 = sphi 0, %s94
    $region4: #{tpu_custom_call.1} parent=1 // loop_header_branch
      %15 = sbr.rel (%p13) target = $region8
    $region5: #{tpu_custom_call.1} parent=1 // loop_body
      %s17 = ssub.s32 %s12, 1
      %s18 = ssub.s32 %s12, 2
      %s19 = sadd.s32 %s12, 1
      %s20 = ssub.s32 %s12, %s19
      %p21 = scmp.eq.s32.totalorder %s20, 0
      %s23 = sadd.s32 %s22, 1
      %s24 = scalar_select %p21, %s22, %s23
      %p27 = pneg %p21
      %p28 = scmp.eq.s32.totalorder %s12, 1
      %p29 = por %p27, %p28
      %p30 = scmp.ne.s32.totalorder %s22, %s25
      %p31 = scmp.eq.s32.totalorder %s12, 0
      %p32 = por %p30, %p31
      %p33 = scmp.ne.s32.totalorder %s22, %s25
      %p34 = scmp.eq.s32.totalorder %s17, 1
      %p35 = por %p33, %p34
      %p36 = scmp.ne.s32.totalorder %s25, %s26
      %p37 = scmp.eq.s32.totalorder %s17, 0
      %p38 = por %p36, %p37
      %p39 = scmp.ne.s32.totalorder %s25, %s26
      %p40 = scmp.eq.s32.totalorder %s18, 1
      %p41 = por %p39, %p40
      %p43 = scmp.ne.s32.totalorder %s26, %s42
      %p44 = scmp.eq.s32.totalorder %s18, 0
      %p45 = por %p43, %p44
      %s47 = sadd.s32 %s46, 1
      %p50 = scmp.eq.s32.totalorder %s12, 1
      %p51 = scmp.ne.s32.totalorder %s46, %s48
      %p52 = scmp.eq.s32.totalorder %s12, 0
      %p53 = por %p51, %p52
      %p54 = scmp.ne.s32.totalorder %s46, %s48
      %p55 = scmp.eq.s32.totalorder %s17, 1
      %p56 = por %p54, %p55
      %p57 = scmp.ne.s32.totalorder %s48, %s49
      %p58 = scmp.eq.s32.totalorder %s17, 0
      %p59 = por %p57, %p58
      %p60 = scmp.ne.s32.totalorder %s48, %s49
      %p61 = scmp.eq.s32.totalorder %s18, 1
      %p62 = por %p60, %p61
      %p64 = scmp.ne.s32.totalorder %s49, %s63
      %p65 = scmp.eq.s32.totalorder %s18, 0
      %p66 = por %p64, %p65
      %s68 = sadd.s32 %s67, 1
      %p71 = scmp.eq.s32.totalorder %s12, 1
      %p72 = scmp.ne.s32.totalorder %s67, %s69
      %p73 = scmp.eq.s32.totalorder %s12, 0
      %p74 = por %p72, %p73
      %p75 = scmp.ne.s32.totalorder %s67, %s69
      %p76 = scmp.eq.s32.totalorder %s17, 1
      %p77 = por %p75, %p76
      %p78 = scmp.ne.s32.totalorder %s69, %s70
      %p79 = scmp.eq.s32.totalorder %s17, 0
      %p80 = por %p78, %p79
      %p81 = scmp.ne.s32.totalorder %s69, %s70
      %p82 = scmp.eq.s32.totalorder %s18, 1
      %p83 = por %p81, %p82
      %p85 = scmp.ne.s32.totalorder %s70, %s84
      %p86 = scmp.eq.s32.totalorder %s18, 0
      %p87 = por %p85, %p86
      %s88 = ssub.s32 %s12, %s19
      %p89 = scmp.eq.s32.totalorder %s88, 0
      %s91 = sadd.s32 %s90, 1
      %s92 = scalar_select %p89, %s90, %s91
      %p95 = pneg %p89
      %p96 = scmp.eq.s32.totalorder %s12, 1
      %p97 = por %p95, %p96
      %p98 = scmp.ne.s32.totalorder %s90, %s93
      %p99 = scmp.eq.s32.totalorder %s12, 0
      %p100 = por %p98, %p99
      %p101 = scmp.ne.s32.totalorder %s90, %s93
      %p102 = scmp.eq.s32.totalorder %s17, 1
      %p103 = por %p101, %p102
      %p104 = scmp.ne.s32.totalorder %s93, %s94
      %p105 = scmp.eq.s32.totalorder %s17, 0
      %p106 = por %p104, %p105
      %p107 = scmp.ne.s32.totalorder %s93, %s94
      %p108 = scmp.eq.s32.totalorder %s18, 1
      %p109 = por %p107, %p108
      %p111 = scmp.ne.s32.totalorder %s94, %s110
      %p112 = scmp.eq.s32.totalorder %s18, 0
      %p113 = por %p111, %p112
      %p114 = scmp.le.s32.totalorder 1, %s12
      %p115 = scmp.lt.s32.totalorder %s12, 3
      %p116 = pnand %p114, %p115
      %p117 = pneg %p116
      // Predicated region
      $region9: #{tpu_custom_call.1} parent=5 // pred_check
        _
      $region10: #{tpu_custom_call.1} parent=5 // pred_check_branch
        %119 = sbr.rel (%p116) target = $region12
      $region11: #{tpu_custom_call.1} parent=5 // pred_region
        %s120 = ssub.s32 %s12, 1
        // Predicated region
        $region13: #{tpu_custom_call.1} parent=11 // pred_check
          %p121 = pneg %p59
        $region14: #{tpu_custom_call.1} parent=11 // pred_check_branch
          %123 = sbr.rel (%p121) target = $region16
        $region15: #{tpu_custom_call.1} parent=11 // pred_region
          _
        $region16: #{tpu_custom_call.1} parent=11 // pred_fallthru
          _
        // Predicated region
        $region17: #{tpu_custom_call.1} parent=11 // pred_check
          %p124 = pneg %p80
        $region18: #{tpu_custom_call.1} parent=11 // pred_check_branch
          %126 = sbr.rel (%p124) target = $region20
        $region19: #{tpu_custom_call.1} parent=11 // pred_region
          _
        $region20: #{tpu_custom_call.1} parent=11 // pred_fallthru
          _
      $region12: #{tpu_custom_call.1} parent=5 // pred_fallthru
        _
      %p127 = scmp.lt.s32.totalorder %s12, 2
      // Predicated region
      $region21: #{tpu_custom_call.1} parent=5 // pred_check
        %p128 = pneg %p127
      $region22: #{tpu_custom_call.1} parent=5 // pred_check_branch
        %130 = sbr.rel (%p128) target = $region24
      $region23: #{tpu_custom_call.1} parent=5 // pred_region
        // Predicated region
        $region25: #{tpu_custom_call.1} parent=23 // pred_check
          %p131 = pneg %p32
        $region26: #{tpu_custom_call.1} parent=23 // pred_check_branch
          %133 = sbr.rel (%p131) target = $region28
        $region27: #{tpu_custom_call.1} parent=23 // pred_region
          %p134 = scmp.lt.s32.totalorder %s12, 1
          %s135 = scalar_select %p134, %s12, 1
          %s136 = smul.addr %s135, 9
          %s137 = smul.addr %s136, 2
          %s138 = scalar_lea.vmem %s0, %s137
        $region28: #{tpu_custom_call.1} parent=23 // pred_fallthru
          _
      $region24: #{tpu_custom_call.1} parent=5 // pred_fallthru
        _
      %p139 = scmp.le.s32.totalorder 1, %s12
      %p140 = scmp.lt.s32.totalorder %s12, 3
      %p141 = pnand %p139, %p140
      %p142 = pneg %p141
      // Predicated region
      $region29: #{tpu_custom_call.1} parent=5 // pred_check
        _
      $region30: #{tpu_custom_call.1} parent=5 // pred_check_branch
        %144 = sbr.rel (%p141) target = $region32
      $region31: #{tpu_custom_call.1} parent=5 // pred_region
        %s145 = ssub.s32 %s12, 1
        %p146 = scmp.lt.s32.totalorder %s17, 1
        %s147 = scalar_select %p146, %s17, 1
        %s148 = smul.addr %s147, 9
        %s149 = smul.addr %s148, 2
        %s150 = scalar_lea.vmem %s0, %s149
        %p151 = pneg %p38
        %p152 = pneg %p35
        %p153 = pneg %p59
        %p154 = pneg %p56
        %p155 = pneg %p80
        %p156 = pneg %p77
        %p157 = pneg %p106
        %p158 = pneg %p103
        %s159 = sand.u32 %s93, 1
        %s160 = scalar_lea.sflag [#allocation3], %s159
        %s161 = sand.u32 %s93, 1
        %s162 = smul.addr %s161, 32
        %s163 = scalar_lea.vmem [#allocation2], %s162
        %p164 = scmp.lt.s32.totalorder %s17, 1
        %s165 = scalar_select %p164, %s17, 1
        %s166 = smul.addr %s165, 9
        %s167 = smul.addr %s166, 2
        %s168 = scalar_lea.vmem %s0, %s167
        %v170 = vld [vmem:[%s168] sm:$0xf]
        %v171 = vld [vmem:[%s1] sm:$0xf]
        %v172 = vld [vmem:[%s1 + $0x4] sm:$0xf]
        %s173 = scalar_lea.vmem %s168, 6
        %v174 = vld [vmem:[%s173] sm:$0xf]
        %s175 = scalar_lea.vmem %s1, 8
        %v176 = vld [vmem:[%s175] sm:$0xf]
        %v177 = vld [vmem:[%s175 + $0x4] sm:$0xf]
        %v180 = vunpack.c.l.b16 %v176
        %v181 = vunpack.c.l.b16 %v177
        %v182 = vpack.c.b16 %v181, %v180
        %v185 = vunpack.c.l.s4 1983009808
        %v186 = vunpack.c.0.s8 %v185
        %v187 = vlaneseq
        %v188 = vshrl.u32 %v187, 7
        %v189 = vsub.s32 %v186, %v188
        %v190 = vrot.slane %v174, %v189
        %v191 = vcombine.high %v190, %v190
        %vm192 = vcmask 31744
        %v194 = vsel %vm192, %v182, 0
        %vm196 = vcmask 1041408
        %v198 = vsel %vm196, %v190, 0
        %v201 = vsel %vm196, %v191, 0
        %203 = vmatprep.subr.bf16.mxu0 %v201
        %204 = vmatpush1.bf16.msra.mxu0 %v198
        %205 = vmatprep.subr.bf16.mxu0 0
        %206 = vmatpush1.bf16.msra.mxu0 0
        %207 = vmatprep.subr.bf16.mxu0 0
        %208 = vmatpush1.bf16.msra.mxu0 0
        %209 = vmatprep.subr.bf16.mxu0 0
        %210 = vmatpush1.bf16.msra.mxu0 0
        %211 = vmatprep.subr.bf16.mxu0 0
        %212 = vmatpush1.bf16.msra.mxu0 0
        %213 = vmatprep.subr.bf16.mxu0 0
        %214 = vmatpush1.bf16.msra.mxu0 0
        %215 = vmatprep.subr.bf16.mxu0 0
        %216 = vmatpush1.bf16.msra.mxu0 0
        %217 = vmatprep.subr.bf16.mxu0 0
        %218 = vmatpush1.bf16.msra.mxu0 0
        %219 = vmatprep.subr.bf16.mxu0 0
        %220 = vmatpush1.bf16.msra.mxu0 0
        %221 = vmatprep.subr.bf16.mxu0 0
        %222 = vmatpush1.bf16.msra.mxu0 0
        %223 = vmatprep.subr.bf16.mxu0 0
        %224 = vmatpush1.bf16.msra.mxu0 0
        %225 = vmatprep.subr.bf16.mxu0 0
        %226 = vmatpush1.bf16.msra.mxu0 0
        %227 = vmatprep.subr.bf16.mxu0 0
        %228 = vmatpush1.bf16.msra.mxu0 0
        %229 = vmatprep.subr.bf16.mxu0 0
        %230 = vmatpush1.bf16.msra.mxu0 0
        %231 = vmatprep.subr.bf16.mxu0 0
        %232 = vmatpush1.bf16.msra.mxu0 0
        %233 = vmatprep.subr.bf16.mxu0 0
        %234 = vmatpush1.bf16.msra.mxu0 0
        %235 = vmatprep.mubr.bf16.mxu0 0
        %236 = vmatmul.mubr.bf16.gmra.mrb[0].mxu0 %v194
        %v237 = vpop.f32.mrb[0].mxu0
        %v238 = vadd.f32 0.0, %v237
        %v239 = vpop.f32.mrb[0].mxu0
        %v240 = vadd.f32 0.0, %v239
        %v241 = vpop.f32.mrb[0].mxu0
        %v242 = vadd.f32 0.0, %v241
        %v243 = vpop.f32.mrb[0].mxu0
        %v244 = vadd.f32 0.0, %v243
        %245 = vdwg.mxu0
        %v248 = vunpack.c.l.b16 %v171
        %v249 = vunpack.c.l.b16 %v172
        %v250 = vpack.c.b16 %v249, %v248
        %v253 = vunpack.c.l.s4 1983009808
        %v254 = vunpack.c.0.s8 %v253
        %v255 = vlaneseq
        %v256 = vshrl.u32 %v255, 7
        %v257 = vsub.s32 %v254, %v256
        %v258 = vrot.slane %v170, %v257
        %v259 = vcombine.high %v258, %v258
        %v261 = vsel %vm192, %v250, 0
        %v264 = vsel %vm196, %v258, 0
        %v267 = vsel %vm196, %v259, 0
        %269 = vmatprep.subr.bf16.mxu0 %v267
        %270 = vmatpush1.bf16.msra.mxu0 %v264
        %271 = vmatprep.subr.bf16.mxu0 0
        %272 = vmatpush1.bf16.msra.mxu0 0
        %273 = vmatprep.subr.bf16.mxu0 0
        %274 = vmatpush1.bf16.msra.mxu0 0
        %275 = vmatprep.subr.bf16.mxu0 0
        %276 = vmatpush1.bf16.msra.mxu0 0
        %277 = vmatprep.subr.bf16.mxu0 0
        %278 = vmatpush1.bf16.msra.mxu0 0
        %279 = vmatprep.subr.bf16.mxu0 0
        %280 = vmatpush1.bf16.msra.mxu0 0
        %281 = vmatprep.subr.bf16.mxu0 0
        %282 = vmatpush1.bf16.msra.mxu0 0
        %283 = vmatprep.subr.bf16.mxu0 0
        %284 = vmatpush1.bf16.msra.mxu0 0
        %285 = vmatprep.subr.bf16.mxu0 0
        %286 = vmatpush1.bf16.msra.mxu0 0
        %287 = vmatprep.subr.bf16.mxu0 0
        %288 = vmatpush1.bf16.msra.mxu0 0
        %289 = vmatprep.subr.bf16.mxu0 0
        %290 = vmatpush1.bf16.msra.mxu0 0
        %291 = vmatprep.subr.bf16.mxu0 0
        %292 = vmatpush1.bf16.msra.mxu0 0
        %293 = vmatprep.subr.bf16.mxu0 0
        %294 = vmatpush1.bf16.msra.mxu0 0
        %295 = vmatprep.subr.bf16.mxu0 0
        %296 = vmatpush1.bf16.msra.mxu0 0
        %297 = vmatprep.subr.bf16.mxu0 0
        %298 = vmatpush1.bf16.msra.mxu0 0
        %299 = vmatprep.subr.bf16.mxu0 0
        %300 = vmatpush1.bf16.msra.mxu0 0
        %301 = vmatprep.mubr.bf16.mxu0 0
        %302 = vmatmul.mubr.bf16.gmra.mrb[0].mxu0 %v261
        %v303 = vpop.f32.mrb[0].mxu0
        %v304 = vadd.f32 %v238, %v303
        %v305 = vpop.f32.mrb[0].mxu0
        %v306 = vadd.f32 %v240, %v305
        %v307 = vpop.f32.mrb[0].mxu0
        %v308 = vadd.f32 %v242, %v307
        %v309 = vpop.f32.mrb[0].mxu0
        %v310 = vadd.f32 %v244, %v309
        %311 = vdwg.mxu0
        %s312 = scalar_lea.vmem %s168, 12
        %v313 = vld [vmem:[%s312] sm:$0xf]
        %s314 = scalar_lea.vmem %s1, 16
        %v315 = vld [vmem:[%s314] sm:$0xf]
        %v316 = vld [vmem:[%s314 + $0x4] sm:$0xf]
        %v319 = vunpack.c.l.b16 %v315
        %v320 = vunpack.c.l.b16 %v316
        %v321 = vpack.c.b16 %v320, %v319
        %v324 = vunpack.c.l.s4 1983009808
        %v325 = vunpack.c.0.s8 %v324
        %v326 = vlaneseq
        %v327 = vshrl.u32 %v326, 7
        %v328 = vsub.s32 %v325, %v327
        %v329 = vrot.slane %v313, %v328
        %v330 = vcombine.high %v329, %v329
        %v332 = vsel %vm192, %v321, 0
        %v335 = vsel %vm196, %v329, 0
        %v338 = vsel %vm196, %v330, 0
        %340 = vmatprep.subr.bf16.mxu0 %v338
        %341 = vmatpush1.bf16.msra.mxu0 %v335
        %342 = vmatprep.subr.bf16.mxu0 0
        %343 = vmatpush1.bf16.msra.mxu0 0
        %344 = vmatprep.subr.bf16.mxu0 0
        %345 = vmatpush1.bf16.msra.mxu0 0
        %346 = vmatprep.subr.bf16.mxu0 0
        %347 = vmatpush1.bf16.msra.mxu0 0
        %348 = vmatprep.subr.bf16.mxu0 0
        %349 = vmatpush1.bf16.msra.mxu0 0
        %350 = vmatprep.subr.bf16.mxu0 0
        %351 = vmatpush1.bf16.msra.mxu0 0
        %352 = vmatprep.subr.bf16.mxu0 0
        %353 = vmatpush1.bf16.msra.mxu0 0
        %354 = vmatprep.subr.bf16.mxu0 0
        %355 = vmatpush1.bf16.msra.mxu0 0
        %356 = vmatprep.subr.bf16.mxu0 0
        %357 = vmatpush1.bf16.msra.mxu0 0
        %358 = vmatprep.subr.bf16.mxu0 0
        %359 = vmatpush1.bf16.msra.mxu0 0
        %360 = vmatprep.subr.bf16.mxu0 0
        %361 = vmatpush1.bf16.msra.mxu0 0
        %362 = vmatprep.subr.bf16.mxu0 0
        %363 = vmatpush1.bf16.msra.mxu0 0
        %364 = vmatprep.subr.bf16.mxu0 0
        %365 = vmatpush1.bf16.msra.mxu0 0
        %366 = vmatprep.subr.bf16.mxu0 0
        %367 = vmatpush1.bf16.msra.mxu0 0
        %368 = vmatprep.subr.bf16.mxu0 0
        %369 = vmatpush1.bf16.msra.mxu0 0
        %370 = vmatprep.subr.bf16.mxu0 0
        %371 = vmatpush1.bf16.msra.mxu0 0
        %372 = vmatprep.mubr.bf16.mxu0 0
        %373 = vmatmul.mubr.bf16.gmra.mrb[0].mxu0 %v332
        %v374 = vpop.f32.mrb[0].mxu0
        %v375 = vadd.f32 0.0, %v374
        %v376 = vpop.f32.mrb[0].mxu0
        %v377 = vadd.f32 0.0, %v376
        %v378 = vpop.f32.mrb[0].mxu0
        %v379 = vadd.f32 0.0, %v378
        %v380 = vpop.f32.mrb[0].mxu0
        %v381 = vadd.f32 0.0, %v380
        %382 = vdwg.mxu0
        %v383 = vadd.f32 %v304, %v375
        %v384 = vadd.f32 %v306, %v377
        %v385 = vadd.f32 %v308, %v379
        %v386 = vadd.f32 %v310, %v381
        %v387 = vld [vmem:[%s168] sm:$0x3f]
        %s388 = scalar_lea.vmem %s1, 24
        %v389 = vld [vmem:[%s388] sm:$0xf]
        %v390 = vld [vmem:[%s388 + $0x4] sm:$0xf]
        %v393 = vunpack.c.l.b16 %v389
        %v394 = vunpack.c.l.b16 %v390
        %v395 = vpack.c.b16 %v394, %v393
        %v397 = vcombine.high %v387, %v387
        %v399 = vunpack.c.l.s4 1983009808
        %v400 = vunpack.c.0.s8 %v399
        %v401 = vlaneseq
        %v402 = vshrl.u32 %v401, 7
        %v403 = vsub.s32 %v400, %v402
        %v404 = vrot.slane %v387, %v403
        %v406 = vunpack.c.l.s4 1983009808
        %v407 = vunpack.c.0.s8 %v406
        %v408 = vlaneseq
        %v409 = vshrl.u32 %v408, 7
        %v410 = vsub.s32 %v407, %v409
        %v411 = vrot.slane %v397, %v410
        %v412 = vcombine.high %v404, %v404
        %413 = vrot.lane.b32.xlu0 %v404, 112
        %v414 = vpop.permute.xlu0 %413
        %415 = vrot.lane.b32.xlu0 %v412, 112
        %v416 = vpop.permute.xlu0 %415
        %417 = vrot.lane.b32.xlu0 %v411, 112
        %v418 = vpop.permute.xlu0 %417
        %vm419 = vcmask 916480
        %v420 = vsel %vm419, %v414, %v416
        %v421 = vsel %vm419, %v416, %v418
        %v423 = vsel %vm192, %v395, 0
        %v426 = vsel %vm196, %v420, 0
        %v429 = vsel %vm196, %v421, 0
        %431 = vmatprep.subr.bf16.mxu0 %v429
        %432 = vmatpush1.bf16.msra.mxu0 %v426
        %433 = vmatprep.subr.bf16.mxu0 0
        %434 = vmatpush1.bf16.msra.mxu0 0
        %435 = vmatprep.subr.bf16.mxu0 0
        %436 = vmatpush1.bf16.msra.mxu0 0
        %437 = vmatprep.subr.bf16.mxu0 0
        %438 = vmatpush1.bf16.msra.mxu0 0
        %439 = vmatprep.subr.bf16.mxu0 0
        %440 = vmatpush1.bf16.msra.mxu0 0
        %441 = vmatprep.subr.bf16.mxu0 0
        %442 = vmatpush1.bf16.msra.mxu0 0
        %443 = vmatprep.subr.bf16.mxu0 0
        %444 = vmatpush1.bf16.msra.mxu0 0
        %445 = vmatprep.subr.bf16.mxu0 0
        %446 = vmatpush1.bf16.msra.mxu0 0
        %447 = vmatprep.subr.bf16.mxu0 0
        %448 = vmatpush1.bf16.msra.mxu0 0
        %449 = vmatprep.subr.bf16.mxu0 0
        %450 = vmatpush1.bf16.msra.mxu0 0
        %451 = vmatprep.subr.bf16.mxu0 0
        %452 = vmatpush1.bf16.msra.mxu0 0
        %453 = vmatprep.subr.bf16.mxu0 0
        %454 = vmatpush1.bf16.msra.mxu0 0
        %455 = vmatprep.subr.bf16.mxu0 0
        %456 = vmatpush1.bf16.msra.mxu0 0
        %457 = vmatprep.subr.bf16.mxu0 0
        %458 = vmatpush1.bf16.msra.mxu0 0
        %459 = vmatprep.subr.bf16.mxu0 0
        %460 = vmatpush1.bf16.msra.mxu0 0
        %461 = vmatprep.subr.bf16.mxu0 0
        %462 = vmatpush1.bf16.msra.mxu0 0
        %463 = vmatprep.mubr.bf16.mxu0 0
        %464 = vmatmul.mubr.bf16.gmra.mrb[0].mxu0 %v423
        %v465 = vpop.f32.mrb[0].mxu0
        %v466 = vadd.f32 0.0, %v465
        %v467 = vpop.f32.mrb[0].mxu0
        %v468 = vadd.f32 0.0, %v467
        %v469 = vpop.f32.mrb[0].mxu0
        %v470 = vadd.f32 0.0, %v469
        %v471 = vpop.f32.mrb[0].mxu0
        %v472 = vadd.f32 0.0, %v471
        %473 = vdwg.mxu0
        %v474 = vadd.f32 %v383, %v466
        %v475 = vadd.f32 %v384, %v468
        %v476 = vadd.f32 %v385, %v470
        %v477 = vadd.f32 %v386, %v472
        %v478 = vld [vmem:[%s173] sm:$0x3f]
        %s479 = scalar_lea.vmem %s1, 32
        %v480 = vld [vmem:[%s479] sm:$0xf]
        %v481 = vld [vmem:[%s479 + $0x4] sm:$0xf]
        %v484 = vunpack.c.l.b16 %v480
        %v485 = vunpack.c.l.b16 %v481
        %v486 = vpack.c.b16 %v485, %v484
        %v488 = vcombine.high %v478, %v478
        %v490 = vunpack.c.l.s4 1983009808
        %v491 = vunpack.c.0.s8 %v490
        %v492 = vlaneseq
        %v493 = vshrl.u32 %v492, 7
        %v494 = vsub.s32 %v491, %v493
        %v495 = vrot.slane %v478, %v494
        %v497 = vunpack.c.l.s4 1983009808
        %v498 = vunpack.c.0.s8 %v497
        %v499 = vlaneseq
        %v500 = vshrl.u32 %v499, 7
        %v501 = vsub.s32 %v498, %v500
        %v502 = vrot.slane %v488, %v501
        %v503 = vcombine.high %v495, %v495
        %504 = vrot.lane.b32.xlu0 %v495, 112
        %v505 = vpop.permute.xlu0 %504
        %506 = vrot.lane.b32.xlu0 %v503, 112
        %v507 = vpop.permute.xlu0 %506
        %508 = vrot.lane.b32.xlu0 %v502, 112
        %v509 = vpop.permute.xlu0 %508
        %v510 = vsel %vm419, %v505, %v507
        %v511 = vsel %vm419, %v507, %v509
        %v513 = vsel %vm192, %v486, 0
        %v516 = vsel %vm196, %v510, 0
        %v519 = vsel %vm196, %v511, 0
        %521 = vmatprep.subr.bf16.mxu0 %v519
        %522 = vmatpush1.bf16.msra.mxu0 %v516
        %523 = vmatprep.subr.bf16.mxu0 0
        %524 = vmatpush1.bf16.msra.mxu0 0
        %525 = vmatprep.subr.bf16.mxu0 0
        %526 = vmatpush1.bf16.msra.mxu0 0
        %527 = vmatprep.subr.bf16.mxu0 0
        %528 = vmatpush1.bf16.msra.mxu0 0
        %529 = vmatprep.subr.bf16.mxu0 0
        %530 = vmatpush1.bf16.msra.mxu0 0
        %531 = vmatprep.subr.bf16.mxu0 0
        %532 = vmatpush1.bf16.msra.mxu0 0
        %533 = vmatprep.subr.bf16.mxu0 0
        %534 = vmatpush1.bf16.msra.mxu0 0
        %535 = vmatprep.subr.bf16.mxu0 0
        %536 = vmatpush1.bf16.msra.mxu0 0
        %537 = vmatprep.subr.bf16.mxu0 0
        %538 = vmatpush1.bf16.msra.mxu0 0
        %539 = vmatprep.subr.bf16.mxu0 0
        %540 = vmatpush1.bf16.msra.mxu0 0
        %541 = vmatprep.subr.bf16.mxu0 0
        %542 = vmatpush1.bf16.msra.mxu0 0
        %543 = vmatprep.subr.bf16.mxu0 0
        %544 = vmatpush1.bf16.msra.mxu0 0
        %545 = vmatprep.subr.bf16.mxu0 0
        %546 = vmatpush1.bf16.msra.mxu0 0
        %547 = vmatprep.subr.bf16.mxu0 0
        %548 = vmatpush1.bf16.msra.mxu0 0
        %549 = vmatprep.subr.bf16.mxu0 0
        %550 = vmatpush1.bf16.msra.mxu0 0
        %551 = vmatprep.subr.bf16.mxu0 0
        %552 = vmatpush1.bf16.msra.mxu0 0
        %553 = vmatprep.mubr.bf16.mxu0 0
        %554 = vmatmul.mubr.bf16.gmra.mrb[0].mxu0 %v513
        %v555 = vpop.f32.mrb[0].mxu0
        %v556 = vadd.f32 0.0, %v555
        %v557 = vpop.f32.mrb[0].mxu0
        %v558 = vadd.f32 0.0, %v557
        %v559 = vpop.f32.mrb[0].mxu0
        %v560 = vadd.f32 0.0, %v559
        %v561 = vpop.f32.mrb[0].mxu0
        %v562 = vadd.f32 0.0, %v561
        %563 = vdwg.mxu0
        %v564 = vadd.f32 %v474, %v556
        %v565 = vadd.f32 %v475, %v558
        %v566 = vadd.f32 %v476, %v560
        %v567 = vadd.f32 %v477, %v562
        %v568 = vld [vmem:[%s312] sm:$0x3f]
        %s569 = scalar_lea.vmem %s1, 40
        %v570 = vld [vmem:[%s569] sm:$0xf]
        %v571 = vld [vmem:[%s569 + $0x4] sm:$0xf]
        %v574 = vunpack.c.l.b16 %v570
        %v575 = vunpack.c.l.b16 %v571
        %v576 = vpack.c.b16 %v575, %v574
        %v578 = vcombine.high %v568, %v568
        %v580 = vunpack.c.l.s4 1983009808
        %v581 = vunpack.c.0.s8 %v580
        %v582 = vlaneseq
        %v583 = vshrl.u32 %v582, 7
        %v584 = vsub.s32 %v581, %v583
        %v585 = vrot.slane %v568, %v584
        %v587 = vunpack.c.l.s4 1983009808
        %v588 = vunpack.c.0.s8 %v587
        %v589 = vlaneseq
        %v590 = vshrl.u32 %v589, 7
        %v591 = vsub.s32 %v588, %v590
        %v592 = vrot.slane %v578, %v591
        %v593 = vcombine.high %v585, %v585
        %594 = vrot.lane.b32.xlu0 %v585, 112
        %v595 = vpop.permute.xlu0 %594
        %596 = vrot.lane.b32.xlu0 %v593, 112
        %v597 = vpop.permute.xlu0 %596
        %598 = vrot.lane.b32.xlu0 %v592, 112
        %v599 = vpop.permute.xlu0 %598
        %v600 = vsel %vm419, %v595, %v597
        %v601 = vsel %vm419, %v597, %v599
        %v603 = vsel %vm192, %v576, 0
        %v606 = vsel %vm196, %v600, 0
        %v609 = vsel %vm196, %v601, 0
        %611 = vmatprep.subr.bf16.mxu0 %v609
        %612 = vmatpush1.bf16.msra.mxu0 %v606
        %613 = vmatprep.subr.bf16.mxu0 0
        %614 = vmatpush1.bf16.msra.mxu0 0
        %615 = vmatprep.subr.bf16.mxu0 0
        %616 = vmatpush1.bf16.msra.mxu0 0
        %617 = vmatprep.subr.bf16.mxu0 0
        %618 = vmatpush1.bf16.msra.mxu0 0
        %619 = vmatprep.subr.bf16.mxu0 0
        %620 = vmatpush1.bf16.msra.mxu0 0
        %621 = vmatprep.subr.bf16.mxu0 0
        %622 = vmatpush1.bf16.msra.mxu0 0
        %623 = vmatprep.subr.bf16.mxu0 0
        %624 = vmatpush1.bf16.msra.mxu0 0
        %625 = vmatprep.subr.bf16.mxu0 0
        %626 = vmatpush1.bf16.msra.mxu0 0
        %627 = vmatprep.subr.bf16.mxu0 0
        %628 = vmatpush1.bf16.msra.mxu0 0
        %629 = vmatprep.subr.bf16.mxu0 0
        %630 = vmatpush1.bf16.msra.mxu0 0
        %631 = vmatprep.subr.bf16.mxu0 0
        %632 = vmatpush1.bf16.msra.mxu0 0
        %633 = vmatprep.subr.bf16.mxu0 0
        %634 = vmatpush1.bf16.msra.mxu0 0
        %635 = vmatprep.subr.bf16.mxu0 0
        %636 = vmatpush1.bf16.msra.mxu0 0
        %637 = vmatprep.subr.bf16.mxu0 0
        %638 = vmatpush1.bf16.msra.mxu0 0
        %639 = vmatprep.subr.bf16.mxu0 0
        %640 = vmatpush1.bf16.msra.mxu0 0
        %641 = vmatprep.subr.bf16.mxu0 0
        %642 = vmatpush1.bf16.msra.mxu0 0
        %643 = vmatprep.mubr.bf16.mxu0 0
        %644 = vmatmul.mubr.bf16.gmra.mrb[0].mxu0 %v603
        %v645 = vpop.f32.mrb[0].mxu0
        %v646 = vadd.f32 0.0, %v645
        %v647 = vpop.f32.mrb[0].mxu0
        %v648 = vadd.f32 0.0, %v647
        %v649 = vpop.f32.mrb[0].mxu0
        %v650 = vadd.f32 0.0, %v649
        %v651 = vpop.f32.mrb[0].mxu0
        %v652 = vadd.f32 0.0, %v651
        %653 = vdwg.mxu0
        %v654 = vadd.f32 %v564, %v646
        %v655 = vadd.f32 %v565, %v648
        %v656 = vadd.f32 %v566, %v650
        %v657 = vadd.f32 %v567, %v652
        %v658 = vld [vmem:[%s168] sm:$0x3f]
        %s659 = scalar_lea.vmem %s1, 48
        %v660 = vld [vmem:[%s659] sm:$0xf]
        %v661 = vld [vmem:[%s659 + $0x4] sm:$0xf]
        %v664 = vunpack.c.l.b16 %v660
        %v665 = vunpack.c.l.b16 %v661
        %v666 = vpack.c.b16 %v665, %v664
        %v668 = vcombine.high %v658, %v658
        %v670 = vunpack.c.l.s4 1983009808
        %v671 = vunpack.c.0.s8 %v670
        %v672 = vlaneseq
        %v673 = vshrl.u32 %v672, 7
        %v674 = vsub.s32 %v671, %v673
        %v675 = vrot.slane %v658, %v674
        %v677 = vunpack.c.l.s4 1983009808
        %v678 = vunpack.c.0.s8 %v677
        %v679 = vlaneseq
        %v680 = vshrl.u32 %v679, 7
        %v681 = vsub.s32 %v678, %v680
        %v682 = vrot.slane %v668, %v681
        %v683 = vcombine.high %v675, %v675
        %684 = vrot.lane.b32.xlu0 %v675, 96
        %v685 = vpop.permute.xlu0 %684
        %686 = vrot.lane.b32.xlu0 %v683, 96
        %v687 = vpop.permute.xlu0 %686
        %688 = vrot.lane.b32.xlu0 %v682, 96
        %v689 = vpop.permute.xlu0 %688
        %vm690 = vcmask 785408
        %v691 = vsel %vm690, %v685, %v687
        %v692 = vsel %vm690, %v687, %v689
        %v694 = vsel %vm192, %v666, 0
        %v697 = vsel %vm196, %v691, 0
        %v700 = vsel %vm196, %v692, 0
        %702 = vmatprep.subr.bf16.mxu0 %v700
        %703 = vmatpush1.bf16.msra.mxu0 %v697
        %704 = vmatprep.subr.bf16.mxu0 0
        %705 = vmatpush1.bf16.msra.mxu0 0
        %706 = vmatprep.subr.bf16.mxu0 0
        %707 = vmatpush1.bf16.msra.mxu0 0
        %708 = vmatprep.subr.bf16.mxu0 0
        %709 = vmatpush1.bf16.msra.mxu0 0
        %710 = vmatprep.subr.bf16.mxu0 0
        %711 = vmatpush1.bf16.msra.mxu0 0
        %712 = vmatprep.subr.bf16.mxu0 0
        %713 = vmatpush1.bf16.msra.mxu0 0
        %714 = vmatprep.subr.bf16.mxu0 0
        %715 = vmatpush1.bf16.msra.mxu0 0
        %716 = vmatprep.subr.bf16.mxu0 0
        %717 = vmatpush1.bf16.msra.mxu0 0
        %718 = vmatprep.subr.bf16.mxu0 0
        %719 = vmatpush1.bf16.msra.mxu0 0
        %720 = vmatprep.subr.bf16.mxu0 0
        %721 = vmatpush1.bf16.msra.mxu0 0
        %722 = vmatprep.subr.bf16.mxu0 0
        %723 = vmatpush1.bf16.msra.mxu0 0
        %724 = vmatprep.subr.bf16.mxu0 0
        %725 = vmatpush1.bf16.msra.mxu0 0
        %726 = vmatprep.subr.bf16.mxu0 0
        %727 = vmatpush1.bf16.msra.mxu0 0
        %728 = vmatprep.subr.bf16.mxu0 0
        %729 = vmatpush1.bf16.msra.mxu0 0
        %730 = vmatprep.subr.bf16.mxu0 0
        %731 = vmatpush1.bf16.msra.mxu0 0
        %732 = vmatprep.subr.bf16.mxu0 0
        %733 = vmatpush1.bf16.msra.mxu0 0
        %734 = vmatprep.mubr.bf16.mxu0 0
        %735 = vmatmul.mubr.bf16.gmra.mrb[0].mxu0 %v694
        %v736 = vpop.f32.mrb[0].mxu0
        %v737 = vadd.f32 0.0, %v736
        %v738 = vpop.f32.mrb[0].mxu0
        %v739 = vadd.f32 0.0, %v738
        %v740 = vpop.f32.mrb[0].mxu0
        %v741 = vadd.f32 0.0, %v740
        %v742 = vpop.f32.mrb[0].mxu0
        %v743 = vadd.f32 0.0, %v742
        %744 = vdwg.mxu0
        %v745 = vadd.f32 %v654, %v737
        %v746 = vadd.f32 %v655, %v739
        %v747 = vadd.f32 %v656, %v741
        %v748 = vadd.f32 %v657, %v743
        %v749 = vld [vmem:[%s173] sm:$0x3f]
        %s750 = scalar_lea.vmem %s1, 56
        %v751 = vld [vmem:[%s750] sm:$0xf]
        %v752 = vld [vmem:[%s750 + $0x4] sm:$0xf]
        %v755 = vunpack.c.l.b16 %v751
        %v756 = vunpack.c.l.b16 %v752
        %v757 = vpack.c.b16 %v756, %v755
        %v759 = vcombine.high %v749, %v749
        %v761 = vunpack.c.l.s4 1983009808
        %v762 = vunpack.c.0.s8 %v761
        %v763 = vlaneseq
        %v764 = vshrl.u32 %v763, 7
        %v765 = vsub.s32 %v762, %v764
        %v766 = vrot.slane %v749, %v765
        %v768 = vunpack.c.l.s4 1983009808
        %v769 = vunpack.c.0.s8 %v768
        %v770 = vlaneseq
        %v771 = vshrl.u32 %v770, 7
        %v772 = vsub.s32 %v769, %v771
        %v773 = vrot.slane %v759, %v772
        %v774 = vcombine.high %v766, %v766
        %775 = vrot.lane.b32.xlu0 %v766, 96
        %v776 = vpop.permute.xlu0 %775
        %777 = vrot.lane.b32.xlu0 %v774, 96
        %v778 = vpop.permute.xlu0 %777
        %779 = vrot.lane.b32.xlu0 %v773, 96
        %v780 = vpop.permute.xlu0 %779
        %v781 = vsel %vm690, %v776, %v778
        %v782 = vsel %vm690, %v778, %v780
        %v784 = vsel %vm192, %v757, 0
        %v787 = vsel %vm196, %v781, 0
        %v790 = vsel %vm196, %v782, 0
        %792 = vmatprep.subr.bf16.mxu0 %v790
        %793 = vmatpush1.bf16.msra.mxu0 %v787
        %794 = vmatprep.subr.bf16.mxu0 0
        %795 = vmatpush1.bf16.msra.mxu0 0
        %796 = vmatprep.subr.bf16.mxu0 0
        %797 = vmatpush1.bf16.msra.mxu0 0
        %798 = vmatprep.subr.bf16.mxu0 0
        %799 = vmatpush1.bf16.msra.mxu0 0
        %800 = vmatprep.subr.bf16.mxu0 0
        %801 = vmatpush1.bf16.msra.mxu0 0
        %802 = vmatprep.subr.bf16.mxu0 0
        %803 = vmatpush1.bf16.msra.mxu0 0
        %804 = vmatprep.subr.bf16.mxu0 0
        %805 = vmatpush1.bf16.msra.mxu0 0
        %806 = vmatprep.subr.bf16.mxu0 0
        %807 = vmatpush1.bf16.msra.mxu0 0
        %808 = vmatprep.subr.bf16.mxu0 0
        %809 = vmatpush1.bf16.msra.mxu0 0
        %810 = vmatprep.subr.bf16.mxu0 0
        %811 = vmatpush1.bf16.msra.mxu0 0
        %812 = vmatprep.subr.bf16.mxu0 0
        %813 = vmatpush1.bf16.msra.mxu0 0
        %814 = vmatprep.subr.bf16.mxu0 0
        %815 = vmatpush1.bf16.msra.mxu0 0
        %816 = vmatprep.subr.bf16.mxu0 0
        %817 = vmatpush1.bf16.msra.mxu0 0
        %818 = vmatprep.subr.bf16.mxu0 0
        %819 = vmatpush1.bf16.msra.mxu0 0
        %820 = vmatprep.subr.bf16.mxu0 0
        %821 = vmatpush1.bf16.msra.mxu0 0
        %822 = vmatprep.subr.bf16.mxu0 0
        %823 = vmatpush1.bf16.msra.mxu0 0
        %824 = vmatprep.mubr.bf16.mxu0 0
        %825 = vmatmul.mubr.bf16.gmra.mrb[0].mxu0 %v784
        %v826 = vpop.f32.mrb[0].mxu0
        %v827 = vadd.f32 0.0, %v826
        %v828 = vpop.f32.mrb[0].mxu0
        %v829 = vadd.f32 0.0, %v828
        %v830 = vpop.f32.mrb[0].mxu0
        %v831 = vadd.f32 0.0, %v830
        %v832 = vpop.f32.mrb[0].mxu0
        %v833 = vadd.f32 0.0, %v832
        %834 = vdwg.mxu0
        %v835 = vadd.f32 %v745, %v827
        %v836 = vadd.f32 %v746, %v829
        %v837 = vadd.f32 %v747, %v831
        %v838 = vadd.f32 %v748, %v833
        %v839 = vld [vmem:[%s312] sm:$0x3f]
        %s840 = scalar_lea.vmem %s1, 64
        %v841 = vld [vmem:[%s840] sm:$0xf]
        %v842 = vld [vmem:[%s840 + $0x4] sm:$0xf]
        %v845 = vunpack.c.l.b16 %v841
        %v846 = vunpack.c.l.b16 %v842
        %v847 = vpack.c.b16 %v846, %v845
        %v849 = vcombine.high %v839, %v839
        %v851 = vunpack.c.l.s4 1983009808
        %v852 = vunpack.c.0.s8 %v851
        %v853 = vlaneseq
        %v854 = vshrl.u32 %v853, 7
        %v855 = vsub.s32 %v852, %v854
        %v856 = vrot.slane %v839, %v855
        %v858 = vunpack.c.l.s4 1983009808
        %v859 = vunpack.c.0.s8 %v858
        %v860 = vlaneseq
        %v861 = vshrl.u32 %v860, 7
        %v862 = vsub.s32 %v859, %v861
        %v863 = vrot.slane %v849, %v862
        %v864 = vcombine.high %v856, %v856
        %865 = vrot.lane.b32.xlu0 %v856, 96
        %v866 = vpop.permute.xlu0 %865
        %867 = vrot.lane.b32.xlu0 %v864, 96
        %v868 = vpop.permute.xlu0 %867
        %869 = vrot.lane.b32.xlu0 %v863, 96
        %v870 = vpop.permute.xlu0 %869
        %v871 = vsel %vm690, %v866, %v868
        %v872 = vsel %vm690, %v868, %v870
        %v874 = vsel %vm192, %v847, 0
        %v877 = vsel %vm196, %v871, 0
        %v880 = vsel %vm196, %v872, 0
        %882 = vmatprep.subr.bf16.mxu0 %v880
        %883 = vmatpush1.bf16.msra.mxu0 %v877
        %884 = vmatprep.subr.bf16.mxu0 0
        %885 = vmatpush1.bf16.msra.mxu0 0
        %886 = vmatprep.subr.bf16.mxu0 0
        %887 = vmatpush1.bf16.msra.mxu0 0
        %888 = vmatprep.subr.bf16.mxu0 0
        %889 = vmatpush1.bf16.msra.mxu0 0
        %890 = vmatprep.subr.bf16.mxu0 0
        %891 = vmatpush1.bf16.msra.mxu0 0
        %892 = vmatprep.subr.bf16.mxu0 0
        %893 = vmatpush1.bf16.msra.mxu0 0
        %894 = vmatprep.subr.bf16.mxu0 0
        %895 = vmatpush1.bf16.msra.mxu0 0
        %896 = vmatprep.subr.bf16.mxu0 0
        %897 = vmatpush1.bf16.msra.mxu0 0
        %898 = vmatprep.subr.bf16.mxu0 0
        %899 = vmatpush1.bf16.msra.mxu0 0
        %900 = vmatprep.subr.bf16.mxu0 0
        %901 = vmatpush1.bf16.msra.mxu0 0
        %902 = vmatprep.subr.bf16.mxu0 0
        %903 = vmatpush1.bf16.msra.mxu0 0
        %904 = vmatprep.subr.bf16.mxu0 0
        %905 = vmatpush1.bf16.msra.mxu0 0
        %906 = vmatprep.subr.bf16.mxu0 0
        %907 = vmatpush1.bf16.msra.mxu0 0
        %908 = vmatprep.subr.bf16.mxu0 0
        %909 = vmatpush1.bf16.msra.mxu0 0
        %910 = vmatprep.subr.bf16.mxu0 0
        %911 = vmatpush1.bf16.msra.mxu0 0
        %912 = vmatprep.subr.bf16.mxu0 0
        %913 = vmatpush1.bf16.msra.mxu0 0
        %914 = vmatprep.mubr.bf16.mxu0 0
        %915 = vmatmul.mubr.bf16.gmra.mrb[0].mxu0 %v874
        %v916 = vpop.f32.mrb[0].mxu0
        %v917 = vadd.f32 0.0, %v916
        %v918 = vpop.f32.mrb[0].mxu0
        %v919 = vadd.f32 0.0, %v918
        %v920 = vpop.f32.mrb[0].mxu0
        %v921 = vadd.f32 0.0, %v920
        %v922 = vpop.f32.mrb[0].mxu0
        %v923 = vadd.f32 0.0, %v922
        %924 = vdwg.mxu0
        %v925 = vadd.f32 %v835, %v917
        %v926 = vadd.f32 %v836, %v919
        %v927 = vadd.f32 %v837, %v921
        %v928 = vadd.f32 %v838, %v923
        %v929 = vld [vmem:[%s2] sm:$0xff]
        %v930 = vld [vmem:[%s2 + $0x8] sm:$0xff]
        %932 = vset.pattern.permute.xlu0 0
        %933 = vperm.xlu0 %932, %v929
        %v934 = vpop.permute.xlu0 %933
        %937 = vset.pattern.permute.xlu0 0
        %938 = vperm.xlu0 %937, %v930
        %v939 = vpop.permute.xlu0 %938
        %v941 = vadd.f32 %v925, %v934
        %v942 = vadd.f32 %v926, %v934
        %v943 = vadd.f32 %v927, %v939
        %v944 = vadd.f32 %v928, %v939
        %945 = vst [vmem:[%s163] sm:$0xff] %v941
        %946 = vst [vmem:[%s163 + $0x8] sm:$0xff] %v942
        %947 = vst [vmem:[%s163 + $0x10] sm:$0xff] %v943
        %948 = vst [vmem:[%s163 + $0x18] sm:$0xff] %v944
        %s949 = sand.u32 %s93, 1
        %s950 = scalar_lea.sflag [#allocation3], %s949
        %s951 = sand.u32 %s93, 1
        %s952 = smul.addr %s951, 32
        %s953 = scalar_lea.vmem [#allocation2], %s952
        // Predicated region
        $region33: #{tpu_custom_call.1} parent=31 // pred_check
          %p954 = pneg %p103
        $region34: #{tpu_custom_call.1} parent=31 // pred_check_branch
          %956 = sbr.rel (%p954) target = $region36
        $region35: #{tpu_custom_call.1} parent=31 // pred_region
          %s958 = ssub.s32 512, 512
          %959 = vsyncadd %s950, %s958
          %s960 = smul.addr %s17, 4
          %s961 = smul.addr %s960, 128
          %s962 = scalar_lea.hbm %s3, %s961
          %s963 = sshll.u32 %s953, 4
          %s964 = int_to_ptr.vmem [resolvable:$true] %s963
          %969 = dma.vmem_to_hbm [thread:$0]  %s964, 512, %s962, %s950, 256, 256, 16
        $region36: #{tpu_custom_call.1} parent=31 // pred_fallthru
          _
      $region32: #{tpu_custom_call.1} parent=5 // pred_fallthru
        _
      %p970 = scmp.le.s32.totalorder 2, %s12
      // Predicated region
      $region37: #{tpu_custom_call.1} parent=5 // pred_check
        %p971 = pneg %p970
      $region38: #{tpu_custom_call.1} parent=5 // pred_check_branch
        %973 = sbr.rel (%p971) target = $region40
      $region39: #{tpu_custom_call.1} parent=5 // pred_region
        %s974 = ssub.s32 %s12, 2
        // Predicated region
        $region41: #{tpu_custom_call.1} parent=39 // pred_check
          %p975 = pneg %p109
        $region42: #{tpu_custom_call.1} parent=39 // pred_check_branch
          %977 = sbr.rel (%p975) target = $region44
        $region43: #{tpu_custom_call.1} parent=39 // pred_region
          %s978 = sand.u32 %s94, 1
          %s979 = scalar_lea.sflag [#allocation3], %s978
          %s980 = sand.u32 %s94, 1
          %s981 = smul.addr %s980, 32
          %s982 = scalar_lea.vmem [#allocation2], %s981
          %983 = dma.done %s979, 512
        $region44: #{tpu_custom_call.1} parent=39 // pred_fallthru
          _
      $region40: #{tpu_custom_call.1} parent=5 // pred_fallthru
        _
    $region6: #{tpu_custom_call.1} parent=1 // loop_footer
      %s16 = sadd.s32 1, %s12
    $region7: #{tpu_custom_call.1} parent=1 // loop_footer_branch
      %11 = sbr.rel target = $region3
    $region8: #{tpu_custom_call.1} parent=1 // loop_exit
      _
    %984 = vsyncpa [#allocation3], 1
    %s985 = scalar_lea.sflag [#allocation3], 1
    %986 = vsyncpa %s985, 1

</llo_original>
